<compile_context>
chip_gen: v7x
topology: tpu7x:2x2x1
jax: 0.10.0
libtpu: 0.0.40
codegen_flags: <defaults>
</compile_context>

<pallas_src>
import math

import jax
import jax.numpy as jnp
from jax.experimental import pallas as pl
from jax.experimental.pallas import tpu as pltpu


_LN2 = math.log(2.0)
_PAD_LOGIT = -1e4          # tanh(-5e3) == -1 exactly  ->  sigmoid(pad) == 0 exactly


def _edice_stats_kernel(x_ref, t_ref, inter_ref, ssum_ref, tsum_ref, lsum_ref):
    """One (outer o, inner i) spatial tile: accumulate per-row partial sums.

    x_ref, t_ref: (rows, hw_tile) logits / targets in their native dtype.
    *_ref outputs: (1, rows, 1) f32 accumulators; the output block index only
    depends on the outer axis, so each block stays resident in VMEM and is
    revisited / accumulated across the inner ("arbitrary") grid axis.
    """
    @pl.when(pl.program_id(1) == 0)
    def _init():
        inter_ref[...] = jnp.zeros_like(inter_ref)
        ssum_ref[...] = jnp.zeros_like(ssum_ref)
        tsum_ref[...] = jnp.zeros_like(tsum_ref)
        lsum_ref[...] = jnp.zeros_like(lsum_ref)

    x = x_ref[...].astype(jnp.float32)          # (rows, hw_tile)
    t = t_ref[...].astype(jnp.float32)

    # sigmoid via a single tanh (1 EUP op instead of exp + Newton divide).
    s = 0.5 * jnp.tanh(0.5 * x) + 0.5
    # BCEWithLogits log term with the sigmoid output fed as the "logits":
    # log(1 + exp(-s)); the argument lies in (1.367, 2], plain log is accurate.
    lterm = jnp.log(1.0 + jnp.exp(-s))

    # The lane reduce lowers to vreg adds + one in-vreg XLU reduce per stat; the
    # XLU slot is otherwise idle here, so it stays hidden under HBM/EUP time.
    inter_ref[0] += jnp.sum(s * t, axis=-1, keepdims=True)
    ssum_ref[0] += jnp.sum(s, axis=-1, keepdims=True)
    tsum_ref[0] += jnp.sum(t, axis=-1, keepdims=True)
    lsum_ref[0] += jnp.sum(lterm, axis=-1, keepdims=True)


def _vmem_budget():
    """(target input-block bytes, vmem_limit_bytes) sized to the local TPU."""
    target, limit = 2 * 1024 * 1024, 32 * 1024 * 1024       # safe on v7x (64 MiB VMEM)
    try:
        cap = getattr(pltpu.get_tpu_info(), "vmem_capacity_bytes", 0) or 0
        if cap >= 96 * 1024 * 1024:                          # v5e / v6e (128 MiB VMEM)
            target, limit = 6 * 1024 * 1024, 64 * 1024 * 1024
    except Exception:
        pass
    return target, limit


def _choose_tiling(hw, n_chan_rows, itemsize, target_block_bytes):
    """Returns (G, rows, hw_tile, width) for the padded (rows, width) view.

    Each of the n_chan_rows = B*C channel rows is split into G equal spatial
    chunks so rows = n_chan_rows * G is a multiple of 8 (full f32 sublanes).
    width (per split row, possibly padded) is a multiple of hw_tile; hw_tile is
    a multiple of 128 chosen so one input block stays within target_block_bytes.
    """
    G = 8 // math.gcd(n_chan_rows, 8)
    rows = n_chan_rows * G
    lane_budget = max(128, (target_block_bytes // max(1, rows * itemsize)) // 128 * 128)

    if hw % G == 0 and (hw // G) % 128 == 0:
        width = hw // G                                      # no padding needed
        if width <= lane_budget:
            return G, rows, width, width
        tile, lanes = 128, 256
        while lanes <= lane_budget:                          # largest 128-multiple divisor
            if width % lanes == 0:
                tile = lanes
            lanes += 128
        return G, rows, tile, width

    # Padded path: round the per-split-row width up to a whole number of tiles.
    w_min = -(-hw // G)
    tile = min(lane_budget, -(-w_min // 128) * 128)
    width = -(-w_min // tile) * tile
    return G, rows, tile, width


def edice_loss2(inputs, target, *, target_block_bytes=None):
    """inputs, target: [B, C, *spatial], any float/int dtype.  Returns f32 scalar."""
    assert inputs.shape == target.shape and inputs.ndim >= 3
    B, C = inputs.shape[0], inputs.shape[1]
    hw = 1
    for d in inputs.shape[2:]:
        hw *= d
    n_chan_rows = B * C

    auto_target, vmem_limit = _vmem_budget()
    if target_block_bytes is None:
        target_block_bytes = auto_target

    itemsize = max(inputs.dtype.itemsize, target.dtype.itemsize)
    G, rows, hw_tile, width = _choose_tiling(hw, n_chan_rows, itemsize, target_block_bytes)
    hw_pad = G * width
    n_tiles = width // hw_tile

    # Outer (megacore-parallel) / inner (sequential reduction) split of the tiles.
    n_outer = 1
    for cand in (4, 3, 2):
        if n_tiles % cand == 0:
            n_outer = cand
            break
    n_inner = n_tiles // n_outer

    # [B, C, *spatial] -> (B*C, hw): contiguous reshape, no transpose / upcast.
    x = inputs.reshape(n_chan_rows, hw)
    t = target.reshape(n_chan_rows, hw)
    if hw_pad != hw:
        # Pad logits so sigmoid == 0 exactly and targets with 0: the only leak is
        # log(2) per pad element into lsum, corrected exactly in the epilogue.
        x = jnp.pad(x, ((0, 0), (0, hw_pad - hw)), constant_values=_PAD_LOGIT)
        t = jnp.pad(t, ((0, 0), (0, hw_pad - hw)), constant_values=0)
    x = x.reshape(rows, width)
    t = t.reshape(rows, width)

    stat_shape = jax.ShapeDtypeStruct((n_outer, rows, 1), jnp.float32)
    stat_spec = pl.BlockSpec((1, rows, 1), lambda o, i: (o, 0, 0))
    in_spec = pl.BlockSpec((rows, hw_tile), lambda o, i: (0, o * n_inner + i))

    inter, ssum, tsum, lsum = pl.pallas_call(
        _edice_stats_kernel,
        out_shape=(stat_shape, stat_shape, stat_shape, stat_shape),
        grid_spec=pltpu.PrefetchScalarGridSpec(
            num_scalar_prefetch=0,
            grid=(n_outer, n_inner),
            in_specs=[in_spec, in_spec],
            out_specs=[stat_spec, stat_spec, stat_spec, stat_spec],
        ),
        compiler_params=pltpu.CompilerParams(
            dimension_semantics=("parallel", "arbitrary"),
            vmem_limit_bytes=vmem_limit,
        ),
    )(x, t)

    # Tiny epilogue in plain JAX: fold outer partials, the G split rows and the
    # batch into per-channel sums, then the wbce / dice / mean combine.
    def per_channel(a):
        a = jnp.sum(a[..., 0], axis=0)                        # (rows,)
        return jnp.sum(a.reshape(B, C, G), axis=(0, 2))       # (C,)

    inter = per_channel(inter)
    ssum = per_channel(ssum)
    tsum = per_channel(tsum)
    lsum = per_channel(lsum) - jnp.float32(B * (hw_pad - hw) * _LN2)

    n_elems = B * hw
    smooth = 1.0
    # sum(s*(1-t)) == sum(s) - sum(s*t), so the full BCE numerator is rebuilt here.
    wbce = (ssum - inter + lsum) / jnp.float32(n_elems)
    dice = 1.0 - (2.0 * inter + smooth) / (ssum + tsum + smooth)
    return jnp.mean(0.2 * wbce + 0.8 * dice)


def _reference_loss(inputs, target):
    """Pure-JAX reference mirroring the PyTorch forward."""
    C = inputs.shape[1]
    total = jnp.float32(0.0)
    for c in range(C):
        x = inputs[:, c].astype(jnp.float32)
        t = target[:, c].astype(jnp.float32)
        s = jax.nn.sigmoid(x)
        bce = jnp.mean(jnp.maximum(s, 0.0) - s * t + jnp.log1p(jnp.exp(-jnp.abs(s))))
        inter = jnp.sum(s * t)
        dice = 1.0 - (2.0 * inter + 1.0) / (jnp.sum(s) + jnp.sum(t) + 1.0)
        total = total + 0.2 * bce + 0.8 * dice
    return total / C


if __name__ == "__main__":
    key = jax.random.PRNGKey(0)
    k1, k2, k3, k4 = jax.random.split(key, 4)

    # Case 1: module-scale shapes; B*C = 8 -> full sublanes, single aligned tile.
    x = jax.random.normal(k1, (2, 4, 16, 16), dtype=jnp.float32)
    t = jax.random.bernoulli(k2, 0.3, (2, 4, 16, 16)).astype(jnp.float32)
    loss = jax.block_until_ready(edice_loss2(x, t))
    ref = jax.block_until_ready(_reference_loss(x, t))
    assert jnp.isfinite(loss), "non-finite loss"
    assert abs(float(loss) - float(ref)) < 5e-5, (float(loss), float(ref))

    # Case 2: Brats-like B*C = 3 with a non-128-aligned spatial extent
    # (exercises the row-split sublane packing and the pad + log(2) correction).
    x2 = jax.random.normal(k3, (1, 3, 50, 50), dtype=jnp.float32)
    t2 = jax.random.bernoulli(k4, 0.4, (1, 3, 50, 50)).astype(jnp.float32)
    loss2 = jax.block_until_ready(edice_loss2(x2, t2))
    ref2 = jax.block_until_ready(_reference_loss(x2, t2))
    assert abs(float(loss2) - float(ref2)) < 5e-5, (float(loss2), float(ref2))

    # Case 3: force several spatial tiles (exercises the outer parallel split and
    # the inner-axis accumulation) by shrinking the per-block byte target.
    x3 = jax.random.normal(k1, (2, 4, 64, 64), dtype=jnp.float32)
    t3 = jax.random.bernoulli(k2, 0.25, (2, 4, 64, 64)).astype(jnp.float32)
    loss3 = jax.block_until_ready(edice_loss2(x3, t3, target_block_bytes=8 * 1024))
    ref3 = jax.block_until_ready(_reference_loss(x3, t3))
    assert abs(float(loss3) - float(ref3)) < 5e-5, (float(loss3), float(ref3))

    print("KERNEL_OK")
</pallas_src>

<mosaic_0001>
module attributes {stable_mosaic.version = 11 : i64} {
  func.func @_edice_stats_kernel(%arg0: i32, %arg1: i32, %arg2: memref<8x256xf32, #tpu.memory_space<vmem>>, %arg3: memref<8x256xf32, #tpu.memory_space<vmem>>, %arg4: memref<1x8x1xf32, #tpu.memory_space<vmem>>, %arg5: memref<1x8x1xf32, #tpu.memory_space<vmem>>, %arg6: memref<1x8x1xf32, #tpu.memory_space<vmem>>, %arg7: memref<1x8x1xf32, #tpu.memory_space<vmem>>) attributes {dimension_semantics = [#tpu.dimension_semantics<parallel>, #tpu.dimension_semantics<arbitrary>], iteration_bounds = array<i64: 1, 1>, scalar_prefetch = 0 : i64, scratch_operands = 0 : i64, tpu.core_type = #tpu.core_type<tc>, window_params = [{transform_indices = @transform_0, window_bounds = array<i64: 8, 256>}, {transform_indices = @transform_1, window_bounds = array<i64: 8, 256>}, {transform_indices = @transform_2, window_bounds = array<i64: 1, 8, 1>}, {transform_indices = @transform_3, window_bounds = array<i64: 1, 8, 1>}, {transform_indices = @transform_4, window_bounds = array<i64: 1, 8, 1>}, {transform_indices = @transform_5, window_bounds = array<i64: 1, 8, 1>}]} {
    %c0_i32 = arith.constant 0 : i32
    %0 = arith.cmpi eq, %arg1, %c0_i32 : i32
    %1 = arith.extui %0 : i1 to i32
    %c0_i32_0 = arith.constant 0 : i32
    %2 = arith.cmpi ne, %1, %c0_i32_0 : i32
    scf.if %2 {
      %cst_36 = arith.constant 0.000000e+00 : f32
      %51 = vector.broadcast %cst_36 : f32 to vector<1x8x1xf32>
      %c0_37 = arith.constant 0 : index
      %c0_38 = arith.constant 0 : index
      %c0_39 = arith.constant 0 : index
      %52 = vector.load %arg4[%c0_37, %c0_38, %c0_39] : memref<1x8x1xf32, #tpu.memory_space<vmem>>, vector<1x8x1xf32>
      tpu.vector_store %arg4[%c0_37, %c0_38, %c0_39], %51 {strides = array<i32>} : memref<1x8x1xf32, #tpu.memory_space<vmem>>, vector<1x8x1xf32>,
      %cst_40 = arith.constant 0.000000e+00 : f32
      %53 = vector.broadcast %cst_40 : f32 to vector<1x8x1xf32>
      %c0_41 = arith.constant 0 : index
      %c0_42 = arith.constant 0 : index
      %c0_43 = arith.constant 0 : index
      %54 = vector.load %arg5[%c0_41, %c0_42, %c0_43] : memref<1x8x1xf32, #tpu.memory_space<vmem>>, vector<1x8x1xf32>
      tpu.vector_store %arg5[%c0_41, %c0_42, %c0_43], %53 {strides = array<i32>} : memref<1x8x1xf32, #tpu.memory_space<vmem>>, vector<1x8x1xf32>,
      %cst_44 = arith.constant 0.000000e+00 : f32
      %55 = vector.broadcast %cst_44 : f32 to vector<1x8x1xf32>
      %c0_45 = arith.constant 0 : index
      %c0_46 = arith.constant 0 : index
      %c0_47 = arith.constant 0 : index
      %56 = vector.load %arg6[%c0_45, %c0_46, %c0_47] : memref<1x8x1xf32, #tpu.memory_space<vmem>>, vector<1x8x1xf32>
      tpu.vector_store %arg6[%c0_45, %c0_46, %c0_47], %55 {strides = array<i32>} : memref<1x8x1xf32, #tpu.memory_space<vmem>>, vector<1x8x1xf32>,
      %cst_48 = arith.constant 0.000000e+00 : f32
      %57 = vector.broadcast %cst_48 : f32 to vector<1x8x1xf32>
      %c0_49 = arith.constant 0 : index
      %c0_50 = arith.constant 0 : index
      %c0_51 = arith.constant 0 : index
      %58 = vector.load %arg7[%c0_49, %c0_50, %c0_51] : memref<1x8x1xf32, #tpu.memory_space<vmem>>, vector<1x8x1xf32>
      tpu.vector_store %arg7[%c0_49, %c0_50, %c0_51], %57 {strides = array<i32>} : memref<1x8x1xf32, #tpu.memory_space<vmem>>, vector<1x8x1xf32>,
    } else {
    }
    %c0 = arith.constant 0 : index
    %c0_1 = arith.constant 0 : index
    %3 = vector.load %arg2[%c0, %c0_1] : memref<8x256xf32, #tpu.memory_space<vmem>>, vector<8x256xf32>
    %c0_2 = arith.constant 0 : index
    %c0_3 = arith.constant 0 : index
    %4 = vector.load %arg3[%c0_2, %c0_3] : memref<8x256xf32, #tpu.memory_space<vmem>>, vector<8x256xf32>
    %cst = arith.constant 5.000000e-01 : f32
    %5 = vector.broadcast %cst : f32 to vector<8x256xf32>
    %6 = arith.mulf %5, %3 : vector<8x256xf32>
    %7 = math.tanh %6 : vector<8x256xf32>
    %cst_4 = arith.constant 5.000000e-01 : f32
    %8 = vector.broadcast %cst_4 : f32 to vector<8x256xf32>
    %9 = arith.mulf %8, %7 : vector<8x256xf32>
    %cst_5 = arith.constant 5.000000e-01 : f32
    %10 = vector.broadcast %cst_5 : f32 to vector<8x256xf32>
    %11 = arith.addf %9, %10 : vector<8x256xf32>
    %cst_6 = arith.constant 0.000000e+00 : f32
    %12 = vector.broadcast %cst_6 : f32 to vector<8x256xf32>
    %13 = arith.subf %12, %11 : vector<8x256xf32>
    %14 = math.exp %13 : vector<8x256xf32>
    %cst_7 = arith.constant 1.000000e+00 : f32
    %15 = vector.broadcast %cst_7 : f32 to vector<8x256xf32>
    %16 = arith.addf %15, %14 : vector<8x256xf32>
    %17 = math.log %16 : vector<8x256xf32>
    %c0_8 = arith.constant 0 : index
    %c0_9 = arith.constant 0 : index
    %c0_10 = arith.constant 0 : index
    %18 = vector.load %arg4[%c0_8, %c0_9, %c0_10] : memref<1x8x1xf32, #tpu.memory_space<vmem>>, vector<1x8x1xf32>
    %19 = vector.shape_cast %18 : vector<1x8x1xf32> to vector<8x1xf32>
    %20 = arith.mulf %11, %4 : vector<8x256xf32>
    %cst_11 = arith.constant dense<0.000000e+00> : vector<8xf32>
    %21 = vector.multi_reduction <add>, %20, %cst_11 [1] : vector<8x256xf32> to vector<8xf32>
    %22 = vector.shape_cast %21 : vector<8xf32> to vector<8x1xf32>
    %23 = arith.addf %19, %22 : vector<8x1xf32>
    %c0_12 = arith.constant 0 : index
    %c0_13 = arith.constant 0 : index
    %c0_14 = arith.constant 0 : index
    %24 = vector.load %arg4[%c0_12, %c0_13, %c0_14] : memref<1x8x1xf32, #tpu.memory_space<vmem>>, vector<1x8x1xf32>
    %25 = vector.shape_cast %24 : vector<1x8x1xf32> to vector<8x1xf32>
    %26 = vector.shape_cast %23 : vector<8x1xf32> to vector<1x8x1xf32>
    tpu.vector_store %arg4[%c0_12, %c0_13, %c0_14], %26 {strides = array<i32>} : memref<1x8x1xf32, #tpu.memory_space<vmem>>, vector<1x8x1xf32>,
    %c0_15 = arith.constant 0 : index
    %c0_16 = arith.constant 0 : index
    %c0_17 = arith.constant 0 : index
    %27 = vector.load %arg5[%c0_15, %c0_16, %c0_17] : memref<1x8x1xf32, #tpu.memory_space<vmem>>, vector<1x8x1xf32>
    %28 = vector.shape_cast %27 : vector<1x8x1xf32> to vector<8x1xf32>
    %cst_18 = arith.constant dense<0.000000e+00> : vector<8xf32>
    %29 = vector.multi_reduction <add>, %11, %cst_18 [1] : vector<8x256xf32> to vector<8xf32>
    %30 = vector.shape_cast %29 : vector<8xf32> to vector<8x1xf32>
    %31 = arith.addf %28, %30 : vector<8x1xf32>
    %c0_19 = arith.constant 0 : index
    %c0_20 = arith.constant 0 : index
    %c0_21 = arith.constant 0 : index
    %32 = vector.load %arg5[%c0_19, %c0_20, %c0_21] : memref<1x8x1xf32, #tpu.memory_space<vmem>>, vector<1x8x1xf32>
    %33 = vector.shape_cast %32 : vector<1x8x1xf32> to vector<8x1xf32>
    %34 = vector.shape_cast %31 : vector<8x1xf32> to vector<1x8x1xf32>
    tpu.vector_store %arg5[%c0_19, %c0_20, %c0_21], %34 {strides = array<i32>} : memref<1x8x1xf32, #tpu.memory_space<vmem>>, vector<1x8x1xf32>,
    %c0_22 = arith.constant 0 : index
    %c0_23 = arith.constant 0 : index
    %c0_24 = arith.constant 0 : index
    %35 = vector.load %arg6[%c0_22, %c0_23, %c0_24] : memref<1x8x1xf32, #tpu.memory_space<vmem>>, vector<1x8x1xf32>
    %36 = vector.shape_cast %35 : vector<1x8x1xf32> to vector<8x1xf32>
    %cst_25 = arith.constant dense<0.000000e+00> : vector<8xf32>
    %37 = vector.multi_reduction <add>, %4, %cst_25 [1] : vector<8x256xf32> to vector<8xf32>
    %38 = vector.shape_cast %37 : vector<8xf32> to vector<8x1xf32>
    %39 = arith.addf %36, %38 : vector<8x1xf32>
    %c0_26 = arith.constant 0 : index
    %c0_27 = arith.constant 0 : index
    %c0_28 = arith.constant 0 : index
    %40 = vector.load %arg6[%c0_26, %c0_27, %c0_28] : memref<1x8x1xf32, #tpu.memory_space<vmem>>, vector<1x8x1xf32>
    %41 = vector.shape_cast %40 : vector<1x8x1xf32> to vector<8x1xf32>
    %42 = vector.shape_cast %39 : vector<8x1xf32> to vector<1x8x1xf32>
    tpu.vector_store %arg6[%c0_26, %c0_27, %c0_28], %42 {strides = array<i32>} : memref<1x8x1xf32, #tpu.memory_space<vmem>>, vector<1x8x1xf32>,
    %c0_29 = arith.constant 0 : index
    %c0_30 = arith.constant 0 : index
    %c0_31 = arith.constant 0 : index
    %43 = vector.load %arg7[%c0_29, %c0_30, %c0_31] : memref<1x8x1xf32, #tpu.memory_space<vmem>>, vector<1x8x1xf32>
    %44 = vector.shape_cast %43 : vector<1x8x1xf32> to vector<8x1xf32>
    %cst_32 = arith.constant dense<0.000000e+00> : vector<8xf32>
    %45 = vector.multi_reduction <add>, %17, %cst_32 [1] : vector<8x256xf32> to vector<8xf32>
    %46 = vector.shape_cast %45 : vector<8xf32> to vector<8x1xf32>
    %47 = arith.addf %44, %46 : vector<8x1xf32>
    %c0_33 = arith.constant 0 : index
    %c0_34 = arith.constant 0 : index
    %c0_35 = arith.constant 0 : index
    %48 = vector.load %arg7[%c0_33, %c0_34, %c0_35] : memref<1x8x1xf32, #tpu.memory_space<vmem>>, vector<1x8x1xf32>
    %49 = vector.shape_cast %48 : vector<1x8x1xf32> to vector<8x1xf32>
    %50 = vector.shape_cast %47 : vector<8x1xf32> to vector<1x8x1xf32>
    tpu.vector_store %arg7[%c0_33, %c0_34, %c0_35], %50 {strides = array<i32>} : memref<1x8x1xf32, #tpu.memory_space<vmem>>, vector<1x8x1xf32>,
    return
  }
  func.func @transform_0(%arg0: i32, %arg1: i32) -> (i32, i32) {
    %c1_i32 = arith.constant 1 : i32
    %0 = arith.muli %arg0, %c1_i32 : i32
    %1 = arith.addi %0, %arg1 : i32
    %c0_i32 = arith.constant 0 : i32
    %c0_i32_0 = arith.constant 0 : i32
    return %c0_i32, %1 : i32, i32
  }
  func.func @transform_1(%arg0: i32, %arg1: i32) -> (i32, i32) {
    %c1_i32 = arith.constant 1 : i32
    %0 = arith.muli %arg0, %c1_i32 : i32
    %1 = arith.addi %0, %arg1 : i32
    %c0_i32 = arith.constant 0 : i32
    %c0_i32_0 = arith.constant 0 : i32
    return %c0_i32, %1 : i32, i32
  }
  func.func @transform_2(%arg0: i32, %arg1: i32) -> (i32, i32, i32) {
    %c0_i32 = arith.constant 0 : i32
    %c0_i32_0 = arith.constant 0 : i32
    %c0_i32_1 = arith.constant 0 : i32
    return %arg0, %c0_i32, %c0_i32_0 : i32, i32, i32
  }
  func.func @transform_3(%arg0: i32, %arg1: i32) -> (i32, i32, i32) {
    %c0_i32 = arith.constant 0 : i32
    %c0_i32_0 = arith.constant 0 : i32
    %c0_i32_1 = arith.constant 0 : i32
    return %arg0, %c0_i32, %c0_i32_0 : i32, i32, i32
  }
  func.func @transform_4(%arg0: i32, %arg1: i32) -> (i32, i32, i32) {
    %c0_i32 = arith.constant 0 : i32
    %c0_i32_0 = arith.constant 0 : i32
    %c0_i32_1 = arith.constant 0 : i32
    return %arg0, %c0_i32, %c0_i32_0 : i32, i32, i32
  }
  func.func @transform_5(%arg0: i32, %arg1: i32) -> (i32, i32, i32) {
    %c0_i32 = arith.constant 0 : i32
    %c0_i32_0 = arith.constant 0 : i32
    %c0_i32_1 = arith.constant 0 : i32
    return %arg0, %c0_i32, %c0_i32_0 : i32, i32, i32
  }
}

</mosaic_0001>

<llo_original>
// kernel: tpu_custom_call.1
$region0: #{tpu_custom_call.1}
  #allocation0 [shape = 'u32[]', space=smem, size = 0x4, offset = 0x4, fixed_abs, tag = 'smem constant byte address 0x4 - core index']
  #allocation1 [shape = 'u32[144,128]{1,0:T(1,128)}', space=vmem, size = 0x12000, scoped, tag = 'internal scratch']
  %s0 = inlined_call_operand.hbm [shape: f32[8,256], index: 0, kind: input, shape index: {}]
  %s1 = inlined_call_operand.hbm [shape: f32[8,256], index: 1, kind: input, shape index: {}]
  %s2 = inlined_call_operand.vmem [shape: f32[1,8,1], index: 2, kind: output, shape index: {0}]
  %s3 = inlined_call_operand.vmem [shape: f32[1,8,1], index: 3, kind: output, shape index: {1}]
  %s4 = inlined_call_operand.vmem [shape: f32[1,8,1], index: 4, kind: output, shape index: {2}]
  %s5 = inlined_call_operand.vmem [shape: f32[1,8,1], index: 5, kind: output, shape index: {3}]
  %6 = xla_tuple %s2, %s3, %s4, %s5
  %s7 = sld [smem:[#allocation0]]
  $region54: #{tpu_custom_call.1} parent=0
    _
  %s9 = ssub.s32 1, %s7
  %s10 = scalar_select 0, %s9, %s7
  $region1: #{tpu_custom_call.1} parent=0
    #allocation2 [shape = 'u8[8192]{0}', space=vmem, size = 0x2000, scoped, tag = 'input window, operand 0, single buffered']
    #allocation3 [shape = 's32[1]{0}', space=sflag, size = 0x4, scoped, tag = 'scoped memory for tpu_custom_call.1']
    #allocation4 [shape = 'u8[8192]{0}', space=vmem, size = 0x2000, scoped, tag = 'input window, operand 1, single buffered']
    #allocation5 [shape = 's32[1]{0}', space=sflag, size = 0x4, scoped, tag = 'scoped memory for tpu_custom_call.1']
    %11 = vsyncpa [#allocation3], 0
    %12 = vsyncpa [#allocation5], 0
    // Predicated region
    $region2: #{tpu_custom_call.1} parent=1 // pred_check
      _
    $region3: #{tpu_custom_call.1} parent=1 // pred_check_branch
      %14 = sbr.rel (0) target = $region5
    $region4: #{tpu_custom_call.1} parent=1 // pred_region
      %s15 = sadd.s32 0, 0
      %s16 = smul.u32 2, %s15
      %s18 = ssub.s32 256, 256
      %19 = vsyncadd [#allocation3], %s18
      %s20 = smul.addr %s16, 128
      %s21 = scalar_lea.hbm %s0, %s20
      %s23 = sshll.u32 [#allocation2], 4
      %s24 = int_to_ptr.vmem [resolvable:$true] %s23
      %26 = dma.hbm_to_vmem [thread:$0]  %s21, 256, %s24, [#allocation3]
    $region5: #{tpu_custom_call.1} parent=1 // pred_fallthru
      _
    // Predicated region
    $region6: #{tpu_custom_call.1} parent=1 // pred_check
      _
    $region7: #{tpu_custom_call.1} parent=1 // pred_check_branch
      %28 = sbr.rel (0) target = $region9
    $region8: #{tpu_custom_call.1} parent=1 // pred_region
      %s29 = sadd.s32 0, 0
      %s30 = smul.u32 2, %s29
      %s32 = ssub.s32 256, 256
      %33 = vsyncadd [#allocation5], %s32
      %s34 = smul.addr %s30, 128
      %s35 = scalar_lea.hbm %s1, %s34
      %s37 = sshll.u32 [#allocation4], 4
      %s38 = int_to_ptr.vmem [resolvable:$true] %s37
      %40 = dma.hbm_to_vmem [thread:$0]  %s35, 256, %s38, [#allocation5]
    $region9: #{tpu_custom_call.1} parent=1 // pred_fallthru
      _
    // Predicated region
    $region10: #{tpu_custom_call.1} parent=1 // pred_check
      _
    $region11: #{tpu_custom_call.1} parent=1 // pred_check_branch
      %42 = sbr.rel (0) target = $region13
    $region12: #{tpu_custom_call.1} parent=1 // pred_region
      %43 = dma.done [#allocation3], 256
    $region13: #{tpu_custom_call.1} parent=1 // pred_fallthru
      _
    // Predicated region
    $region14: #{tpu_custom_call.1} parent=1 // pred_check
      _
    $region15: #{tpu_custom_call.1} parent=1 // pred_check_branch
      %45 = sbr.rel (0) target = $region17
    $region16: #{tpu_custom_call.1} parent=1 // pred_region
      %46 = dma.done [#allocation5], 256
    $region17: #{tpu_custom_call.1} parent=1 // pred_fallthru
      _
    %s47 = sadd.s32 0, 0
    %s48 = smul.u32 2, %s47
    %s49 = sadd.s32 0, 0
    %s50 = smul.u32 2, %s49
    %p51 = scmp.eq.s32.totalorder 0, 0
    // Predicated region
    $region18: #{tpu_custom_call.1} parent=1 // pred_check
      %p52 = pneg %p51
    $region19: #{tpu_custom_call.1} parent=1 // pred_check_branch
      %54 = sbr.rel (%p52) target = $region21
    $region20: #{tpu_custom_call.1} parent=1 // pred_region
      %vm55 = vcmask 7168
      %56 = vst.msk [vmem:[%s2] sm:$0xff] %vm55, 0.0
      %57 = vst.msk [vmem:[%s3] sm:$0xff] %vm55, 0.0
      %58 = vst.msk [vmem:[%s4] sm:$0xff] %vm55, 0.0
      %59 = vst.msk [vmem:[%s5] sm:$0xff] %vm55, 0.0
    $region21: #{tpu_custom_call.1} parent=1 // pred_fallthru
      _
    %v60 = vld [vmem:[#allocation2] sm:$0xff]
    %v61 = vld [vmem:[#allocation2 + $0x8] sm:$0xff]
    %v62 = vld [vmem:[#allocation4] sm:$0xff]
    %v63 = vld [vmem:[#allocation4 + $0x8] sm:$0xff]
    %v64 = vmul.f32 %v60, 0.5
    %v65 = vmul.f32 %v61, 0.5
    %v66 = vtanh.pop %v64
    %v67 = vtanh.pop %v65
    %v68 = vmul.f32 %v66, 0.5
    %v69 = vmul.f32 %v67, 0.5
    %v70 = vadd.f32 %v68, 0.5
    %v71 = vadd.f32 %v69, 0.5
    %v72 = vsub.f32 0.0, %v70
    %v73 = vsub.f32 0.0, %v71
    %v74 = vmul.f32 %v72, 1.442695
    %v75 = vpow.pop %v74
    %v76 = vmul.f32 %v73, 1.442695
    %v77 = vpow.pop %v76
    %v78 = vadd.f32 %v75, 1.0
    %v79 = vadd.f32 %v77, 1.0
    %v80 = vlog2.pop %v78
    %v81 = vmul.f32 %v80, 0.6931472
    %v82 = vlog2.pop %v79
    %v83 = vmul.f32 %v82, 0.6931472
    %v84 = vld [vmem:[%s2] sm:$0xff]
    %v85 = vmul.f32 %v70, %v62
    %v86 = vmul.f32 %v71, %v63
    %v87 = vadd.f32 %v85, %v86
    %88 = vadd.xlane.f32.xlu0 %v87
    %v89 = vpop.xlane.xlu0 %88
    %v90 = vadd.f32 %v84, %v89
    %vm91 = vcmask 7168
    %92 = vst.msk [vmem:[%s2] sm:$0xff] %vm91, %v90
    %v93 = vld [vmem:[%s3] sm:$0xff]
    %v94 = vadd.f32 %v70, %v71
    %95 = vadd.xlane.f32.xlu0 %v94
    %v96 = vpop.xlane.xlu0 %95
    %v97 = vadd.f32 %v93, %v96
    %98 = vst.msk [vmem:[%s3] sm:$0xff] %vm91, %v97
    %v99 = vld [vmem:[%s4] sm:$0xff]
    %v100 = vadd.f32 %v62, %v63
    %101 = vadd.xlane.f32.xlu0 %v100
    %v102 = vpop.xlane.xlu0 %101
    %v103 = vadd.f32 %v99, %v102
    %104 = vst.msk [vmem:[%s4] sm:$0xff] %vm91, %v103
    %v105 = vld [vmem:[%s5] sm:$0xff]
    %v106 = vadd.f32 %v81, %v83
    %107 = vadd.xlane.f32.xlu0 %v106
    %v108 = vpop.xlane.xlu0 %107
    %v109 = vadd.f32 %v105, %v108
    %110 = vst.msk [vmem:[%s5] sm:$0xff] %vm91, %v109
    // Predicated region
    $region22: #{tpu_custom_call.1} parent=1 // pred_check
      _
    $region23: #{tpu_custom_call.1} parent=1 // pred_check_branch
      %112 = sbr.rel (0) target = $region25
    $region24: #{tpu_custom_call.1} parent=1 // pred_region
      _
    $region25: #{tpu_custom_call.1} parent=1 // pred_fallthru
      _
    // Predicated region
    $region26: #{tpu_custom_call.1} parent=1 // pred_check
      _
    $region27: #{tpu_custom_call.1} parent=1 // pred_check_branch
      %114 = sbr.rel (0) target = $region29
    $region28: #{tpu_custom_call.1} parent=1 // pred_region
      _
    $region29: #{tpu_custom_call.1} parent=1 // pred_fallthru
      _
    // Predicated region
    $region30: #{tpu_custom_call.1} parent=1 // pred_check
      _
    $region31: #{tpu_custom_call.1} parent=1 // pred_check_branch
      %116 = sbr.rel (0) target = $region33
    $region32: #{tpu_custom_call.1} parent=1 // pred_region
      _
    $region33: #{tpu_custom_call.1} parent=1 // pred_fallthru
      _
    // Predicated region
    $region34: #{tpu_custom_call.1} parent=1 // pred_check
      _
    $region35: #{tpu_custom_call.1} parent=1 // pred_check_branch
      %118 = sbr.rel (0) target = $region37
    $region36: #{tpu_custom_call.1} parent=1 // pred_region
      _
    $region37: #{tpu_custom_call.1} parent=1 // pred_fallthru
      _
    // Predicated region
    $region38: #{tpu_custom_call.1} parent=1 // pred_check
      _
    $region39: #{tpu_custom_call.1} parent=1 // pred_check_branch
      %120 = sbr.rel (0) target = $region41
    $region40: #{tpu_custom_call.1} parent=1 // pred_region
      _
    $region41: #{tpu_custom_call.1} parent=1 // pred_fallthru
      _
    // Predicated region
    $region42: #{tpu_custom_call.1} parent=1 // pred_check
      _
    $region43: #{tpu_custom_call.1} parent=1 // pred_check_branch
      %122 = sbr.rel (0) target = $region45
    $region44: #{tpu_custom_call.1} parent=1 // pred_region
      _
    $region45: #{tpu_custom_call.1} parent=1 // pred_fallthru
      _
    // Predicated region
    $region46: #{tpu_custom_call.1} parent=1 // pred_check
      _
    $region47: #{tpu_custom_call.1} parent=1 // pred_check_branch
      %124 = sbr.rel (0) target = $region49
    $region48: #{tpu_custom_call.1} parent=1 // pred_region
      _
    $region49: #{tpu_custom_call.1} parent=1 // pred_fallthru
      _
    // Predicated region
    $region50: #{tpu_custom_call.1} parent=1 // pred_check
      _
    $region51: #{tpu_custom_call.1} parent=1 // pred_check_branch
      %126 = sbr.rel (0) target = $region53
    $region52: #{tpu_custom_call.1} parent=1 // pred_region
      _
    $region53: #{tpu_custom_call.1} parent=1 // pred_fallthru
      _
    %127 = vsyncpa [#allocation3], 1
    %128 = vsyncpa [#allocation5], 1

</llo_original>
